<compile_context>
chip_gen: v7x
topology: tpu7x:2x2x1
jax: 0.10.0
libtpu: 0.0.40
codegen_flags: <defaults>
</compile_context>

<pallas_src>
import math
import jax
import jax.numpy as jnp
from jax.experimental import pallas as pl
from jax.experimental.pallas import tpu as pltpu

B, L, C, D = 2, 8, 4, 32   # batch, seq, c_in, d_model

_UNROLL_C_MAX = 8          # below this, skip the MXU entirely (VPU unroll)
_MAX_TILE_M = 512          # rows per grid step at scale (keeps VMEM + DMA happy)


def _make_kernel(c_in: int):
    """Kernel body: (tile_m, C) x (C, D) -> (tile_m, D), f32."""
    if c_in <= _UNROLL_C_MAX:
        # VPU contraction, Python-unrolled over the tiny K dim.
        # x[:, c:c+1] lane-broadcasts, w[c:c+1, :] sublane-broadcasts; the
        # critical path is a handful of vmul/vadd bundles (no MXU fill/drain).
        def kernel(x_ref, w_ref, o_ref):
            x = x_ref[...]                       # (tile_m, C)
            w = w_ref[...]                       # (C, D)
            acc = x[:, 0:1] * w[0:1, :]
            for c in range(1, c_in):
                acc = acc + x[:, c:c + 1] * w[c:c + 1, :]
            o_ref[...] = acc
    else:
        # Large contraction dim: single aligned MXU dot with f32 accumulation.
        def kernel(x_ref, w_ref, o_ref):
            o_ref[...] = jnp.dot(
                x_ref[...], w_ref[...], preferred_element_type=jnp.float32
            )
    return kernel


def token_embedding_edges(x, w):
    """x: (B, L, C) f32, w: (C, D) f32  (PyTorch Linear weight transposed).
    Returns (B, L, D) f32 == x @ w."""
    b, l, c = x.shape
    c2, d = w.shape
    assert c2 == c
    m = b * l
    x2d = x.reshape(m, c)                        # flatten batch+seq -> one M dim

    # Tile the M dimension so the kernel scales past the scoped-VMEM limit.
    # At toy sizes this is a single grid step with everything resident.
    tile_m = m if m <= _MAX_TILE_M else _MAX_TILE_M
    grid = (pl.cdiv(m, tile_m),)

    cost = pl.CostEstimate(
        flops=2 * m * d * c,
        transcendentals=0,
        bytes_accessed=4 * (m * c + c * d + m * d),
    )

    out2d = pl.pallas_call(
        _make_kernel(c),
        out_shape=jax.ShapeDtypeStruct((m, d), jnp.float32),
        grid=grid,
        in_specs=[
            pl.BlockSpec((tile_m, c), lambda i: (i, 0)),   # M-tiled activations
            pl.BlockSpec((c, d), lambda i: (0, 0)),        # full weight, resident
        ],
        out_specs=pl.BlockSpec((tile_m, d), lambda i: (i, 0)),
        compiler_params=pltpu.CompilerParams(
            dimension_semantics=("parallel",),             # let v7x's 2 TCs split M
        ),
        cost_estimate=cost,
    )(x2d, w)
    return out2d.reshape(b, l, d)


def reference(x, w):
    return jnp.einsum("blc,cd->bld", x, w)


if __name__ == "__main__":
    key = jax.random.PRNGKey(0)
    k_x, k_w = jax.random.split(key)

    # Input (B, L, c_in)
    x = jax.random.normal(k_x, (B, L, C), jnp.float32)

    # Linear weight: torch stores (d_model, c_in); forward computes x @ W.T.
    # We pass W.T, i.e. a (c_in, d_model) matrix.
    w_torch = (1.0 / math.sqrt(C)) * jax.random.normal(k_w, (D, C), jnp.float32)
    w = w_torch.T  # (C, D)

    out = token_embedding_edges(x, w)
    out = jax.block_until_ready(out)

    ref = reference(x, w)
    assert out.shape == (B, L, D) and out.dtype == jnp.float32
    assert jnp.allclose(out, ref, rtol=1e-5, atol=1e-5), float(jnp.abs(out - ref).max())

    print("KERNEL_OK")
</pallas_src>

<mosaic_0001>
module attributes {stable_mosaic.version = 11 : i64} {
  func.func @kernel(%arg0: i32, %arg1: memref<16x4xf32, #tpu.memory_space<vmem>>, %arg2: memref<4x32xf32, #tpu.memory_space<vmem>>, %arg3: memref<16x32xf32, #tpu.memory_space<vmem>>) attributes {dimension_semantics = [#tpu.dimension_semantics<parallel>], iteration_bounds = array<i64: 1>, scalar_prefetch = 0 : i64, scratch_operands = 0 : i64, tpu.core_type = #tpu.core_type<tc>, window_params = [{transform_indices = @transform_0, window_bounds = array<i64: 16, 4>}, {pipeline_mode = #tpu.pipeline_mode<synchronous>, transform_indices = @transform_1, window_bounds = array<i64: 4, 32>}, {transform_indices = @transform_2, window_bounds = array<i64: 16, 32>}]} {
    %c0 = arith.constant 0 : index
    %c0_0 = arith.constant 0 : index
    %0 = vector.load %arg1[%c0, %c0_0] : memref<16x4xf32, #tpu.memory_space<vmem>>, vector<16x4xf32>
    %c0_1 = arith.constant 0 : index
    %c0_2 = arith.constant 0 : index
    %1 = vector.load %arg2[%c0_1, %c0_2] : memref<4x32xf32, #tpu.memory_space<vmem>>, vector<4x32xf32>
    %2 = vector.extract_strided_slice %0 {offsets = [0, 0], sizes = [16, 1], strides = [1, 1]} : vector<16x4xf32> to vector<16x1xf32>
    %3 = vector.extract_strided_slice %1 {offsets = [0, 0], sizes = [1, 32], strides = [1, 1]} : vector<4x32xf32> to vector<1x32xf32>
    %4 = vector.broadcast %2 : vector<16x1xf32> to vector<16x32xf32>
    %5 = vector.broadcast %3 : vector<1x32xf32> to vector<16x32xf32>
    %6 = arith.mulf %4, %5 : vector<16x32xf32>
    %7 = vector.extract_strided_slice %0 {offsets = [0, 1], sizes = [16, 1], strides = [1, 1]} : vector<16x4xf32> to vector<16x1xf32>
    %8 = vector.extract_strided_slice %1 {offsets = [1, 0], sizes = [1, 32], strides = [1, 1]} : vector<4x32xf32> to vector<1x32xf32>
    %9 = vector.broadcast %7 : vector<16x1xf32> to vector<16x32xf32>
    %10 = vector.broadcast %8 : vector<1x32xf32> to vector<16x32xf32>
    %11 = arith.mulf %9, %10 : vector<16x32xf32>
    %12 = arith.addf %6, %11 : vector<16x32xf32>
    %13 = vector.extract_strided_slice %0 {offsets = [0, 2], sizes = [16, 1], strides = [1, 1]} : vector<16x4xf32> to vector<16x1xf32>
    %14 = vector.extract_strided_slice %1 {offsets = [2, 0], sizes = [1, 32], strides = [1, 1]} : vector<4x32xf32> to vector<1x32xf32>
    %15 = vector.broadcast %13 : vector<16x1xf32> to vector<16x32xf32>
    %16 = vector.broadcast %14 : vector<1x32xf32> to vector<16x32xf32>
    %17 = arith.mulf %15, %16 : vector<16x32xf32>
    %18 = arith.addf %12, %17 : vector<16x32xf32>
    %19 = vector.extract_strided_slice %0 {offsets = [0, 3], sizes = [16, 1], strides = [1, 1]} : vector<16x4xf32> to vector<16x1xf32>
    %20 = vector.extract_strided_slice %1 {offsets = [3, 0], sizes = [1, 32], strides = [1, 1]} : vector<4x32xf32> to vector<1x32xf32>
    %21 = vector.broadcast %19 : vector<16x1xf32> to vector<16x32xf32>
    %22 = vector.broadcast %20 : vector<1x32xf32> to vector<16x32xf32>
    %23 = arith.mulf %21, %22 : vector<16x32xf32>
    %24 = arith.addf %18, %23 : vector<16x32xf32>
    %c0_3 = arith.constant 0 : index
    %c0_4 = arith.constant 0 : index
    %25 = vector.load %arg3[%c0_3, %c0_4] : memref<16x32xf32, #tpu.memory_space<vmem>>, vector<16x32xf32>
    tpu.vector_store %arg3[%c0_3, %c0_4], %24 {strides = array<i32>} : memref<16x32xf32, #tpu.memory_space<vmem>>, vector<16x32xf32>,
    return
  }
  func.func @transform_0(%arg0: i32) -> (i32, i32) {
    %c0_i32 = arith.constant 0 : i32
    %c0_i32_0 = arith.constant 0 : i32
    return %arg0, %c0_i32 : i32, i32
  }
  func.func @transform_1(%arg0: i32) -> (i32, i32) {
    %c0_i32 = arith.constant 0 : i32
    %c0_i32_0 = arith.constant 0 : i32
    %c0_i32_1 = arith.constant 0 : i32
    return %c0_i32, %c0_i32_0 : i32, i32
  }
  func.func @transform_2(%arg0: i32) -> (i32, i32) {
    %c0_i32 = arith.constant 0 : i32
    %c0_i32_0 = arith.constant 0 : i32
    return %arg0, %c0_i32 : i32, i32
  }
}

</mosaic_0001>

<llo_original>
// kernel: tpu_custom_call.1
$region0: #{tpu_custom_call.1}
  #allocation0 [shape = 'u32[]', space=smem, size = 0x4, offset = 0x4, fixed_abs, tag = 'smem constant byte address 0x4 - core index']
  #allocation1 [shape = 'u32[144,128]{1,0:T(1,128)}', space=vmem, size = 0x12000, scoped, tag = 'internal scratch']
  %s0 = inlined_call_operand.vmem [shape: f32[16,4], index: 0, kind: input, shape index: {}]
  %s1 = inlined_call_operand.vmem [shape: f32[4,32], index: 1, kind: input, shape index: {}]
  %s2 = inlined_call_operand.hbm [shape: f32[16,32], index: 2, kind: output, shape index: {}]
  %s3 = sld [smem:[#allocation0]]
  $region18: #{tpu_custom_call.1} parent=0
    _
  %s5 = ssub.s32 1, %s3
  %s6 = scalar_select 0, %s5, %s3
  $region1: #{tpu_custom_call.1} parent=0
    #allocation2 [shape = 'u8[8192]{0}', space=vmem, size = 0x2000, scoped, tag = 'output window, operand 0, single buffered']
    #allocation3 [shape = 's32[1]{0}', space=sflag, size = 0x4, scoped, tag = 'scoped memory for tpu_custom_call.1']
    %7 = vsyncpa [#allocation3], 0
    // Predicated region
    $region2: #{tpu_custom_call.1} parent=1 // pred_check
      _
    $region3: #{tpu_custom_call.1} parent=1 // pred_check_branch
      %9 = sbr.rel (0) target = $region5
    $region4: #{tpu_custom_call.1} parent=1 // pred_region
      _
    $region5: #{tpu_custom_call.1} parent=1 // pred_fallthru
      _
    // Predicated region
    $region6: #{tpu_custom_call.1} parent=1 // pred_check
      _
    $region7: #{tpu_custom_call.1} parent=1 // pred_check_branch
      %11 = sbr.rel (0) target = $region9
    $region8: #{tpu_custom_call.1} parent=1 // pred_region
      _
    $region9: #{tpu_custom_call.1} parent=1 // pred_fallthru
      _
    %v12 = vld [vmem:[%s0] sm:$0xff]
    %v13 = vld [vmem:[%s0 + $0x8] sm:$0xff]
    %v14 = vld [vmem:[%s1] sm:$0xf]
    %16 = vset.pattern.permute.xlu0 0
    %17 = vperm.xlu0 %16, %v12
    %v18 = vpop.permute.xlu0 %17
    %21 = vset.pattern.permute.xlu0 0
    %22 = vperm.xlu0 %21, %v13
    %v23 = vpop.permute.xlu0 %22
    %v25 = vlaneseq
    %v26 = vshrl.u32 %v25, 7
    %v27 = vsub.s32 0, %v26
    %v28 = vrot.slane %v14, %v27
    %v29 = vmul.f32 %v18, %v28
    %v30 = vmul.f32 %v23, %v28
    %31 = vset.pattern.permute.xlu0 1
    %32 = vperm.xlu0 %31, %v12
    %v33 = vpop.permute.xlu0 %32
    %35 = vset.pattern.permute.xlu0 1
    %36 = vperm.xlu0 %35, %v13
    %v37 = vpop.permute.xlu0 %36
    %v39 = vlaneseq
    %v40 = vshrl.u32 %v39, 7
    %v41 = vsub.s32 1, %v40
    %v42 = vrot.slane %v14, %v41
    %v43 = vmul.f32 %v33, %v42
    %v44 = vmul.f32 %v37, %v42
    %v45 = vadd.f32 %v29, %v43
    %v46 = vadd.f32 %v30, %v44
    %47 = vset.pattern.permute.xlu0 2
    %48 = vperm.xlu0 %47, %v12
    %v49 = vpop.permute.xlu0 %48
    %51 = vset.pattern.permute.xlu0 2
    %52 = vperm.xlu0 %51, %v13
    %v53 = vpop.permute.xlu0 %52
    %v55 = vlaneseq
    %v56 = vshrl.u32 %v55, 7
    %v57 = vsub.s32 2, %v56
    %v58 = vrot.slane %v14, %v57
    %v59 = vmul.f32 %v49, %v58
    %v60 = vmul.f32 %v53, %v58
    %v61 = vadd.f32 %v45, %v59
    %v62 = vadd.f32 %v46, %v60
    %63 = vset.pattern.permute.xlu0 3
    %64 = vperm.xlu0 %63, %v12
    %v65 = vpop.permute.xlu0 %64
    %67 = vset.pattern.permute.xlu0 3
    %68 = vperm.xlu0 %67, %v13
    %v69 = vpop.permute.xlu0 %68
    %v71 = vlaneseq
    %v72 = vshrl.u32 %v71, 7
    %v73 = vsub.s32 3, %v72
    %v74 = vrot.slane %v14, %v73
    %v75 = vmul.f32 %v65, %v74
    %v76 = vmul.f32 %v69, %v74
    %v77 = vadd.f32 %v61, %v75
    %v78 = vadd.f32 %v62, %v76
    %vm79 = vcmask 261120
    %80 = vst.msk [vmem:[#allocation2] sm:$0xff] %vm79, %v77
    %81 = vst.msk [vmem:[#allocation2 + $0x8] sm:$0xff] %vm79, %v78
    // Predicated region
    $region10: #{tpu_custom_call.1} parent=1 // pred_check
      _
    $region11: #{tpu_custom_call.1} parent=1 // pred_check_branch
      %83 = sbr.rel (0) target = $region13
    $region12: #{tpu_custom_call.1} parent=1 // pred_region
      %s85 = ssub.s32 256, 256
      %86 = vsyncadd [#allocation3], %s85
      %s87 = sshll.u32 [#allocation2], 4
      %s88 = int_to_ptr.vmem [resolvable:$true] %s87
      %93 = dma.vmem_to_hbm [thread:$0]  %s88, 256, %s2, [#allocation3], 128, 128, 8
    $region13: #{tpu_custom_call.1} parent=1 // pred_fallthru
      _
    // Predicated region
    $region14: #{tpu_custom_call.1} parent=1 // pred_check
      _
    $region15: #{tpu_custom_call.1} parent=1 // pred_check_branch
      %95 = sbr.rel (0) target = $region17
    $region16: #{tpu_custom_call.1} parent=1 // pred_region
      %96 = dma.done [#allocation3], 256
    $region17: #{tpu_custom_call.1} parent=1 // pred_fallthru
      _
    %97 = vsyncpa [#allocation3], 1

</llo_original>
